<compile_context>
chip_gen: v7x
topology: tpu7x:2x2x1
jax: 0.10.0
libtpu: 0.0.40
codegen_flags: <defaults>
</compile_context>

<pallas_src>
import functools

import jax
import jax.numpy as jnp
from jax import lax
from jax.experimental import pallas as pl
from jax.experimental.pallas import tpu as pltpu


def _round_up(x, m):
    return ((x + m - 1) // m) * m


def _c2mpir_kernel(invn_ref, c0_ref, c1s_ref, h_ref, *, Mp, Np, TB):
    """Pallas kernel body (one batch tile of TB lanes).

    invn_ref : SMEM (Np,)       precomputed 1/n table (invn[0] unused)
    c0_ref   : VMEM (1, TB)     c[0] per batch lane
    c1s_ref  : VMEM (8*Mp, TB)  8 shifted copies of the padded, flipped,
                                ramp-weighted cepstrum: c1s[s*Mp + k] = c1p[k-s]
    h_ref    : VMEM (Np, TB)    output impulse response (time on sublanes)
    """
    f32 = jnp.float32
    G = Np // 8  # number of 8-row groups (Np is a multiple of 8)

    def step_value(win, new, s, n_idx):
        # n * h[n] = <pre-group history , coeffs shifted by s>
        #          + sum_{d=1..s} h[n-d] * c1p[Mp-d]   (in-group rows)
        terms = []
        if win is not None:
            c1shift = c1s_ref[s * Mp:(s + 1) * Mp, :]            # aligned slice
            terms.append(jnp.sum(win * c1shift, axis=0, keepdims=True))
        for d in range(1, s + 1):
            terms.append(new[s - d] * c1s_ref[Mp - d:Mp - d + 1, :])
        num = terms[0]
        for t in terms[1:]:
            num = num + t
        return num * invn_ref[n_idx]                             # (1, TB)

    # ---- group 0: h[0] = exp(c[0]); pre-group history is all zeros -------
    new = [jnp.exp(c0_ref[...].astype(f32))]                     # (1, TB)
    for s in range(1, 8):
        new.append(step_value(None, new, s, s))
    block = jnp.concatenate(new, axis=0)                         # (8, TB)
    h_ref[0:8, :] = block
    if Mp == 8:
        win = block
    else:
        win = jnp.concatenate([jnp.zeros((Mp - 8, TB), f32), block], axis=0)

    # ---- remaining groups: 8 unrolled recursion steps per fori iteration --
    def group_body(g, win):
        base = pl.multiple_of(g * 8, 8)
        rows = []
        for s in range(8):
            rows.append(step_value(win, rows, s, base + s))
        blk = jnp.concatenate(rows, axis=0)                      # (8, TB)
        h_ref[pl.ds(base, 8), :] = blk                           # aligned 8-row store
        if Mp == 8:
            return blk
        return jnp.concatenate([win[8:, :], blk], axis=0)        # aligned slice

    if G > 1:
        lax.fori_loop(1, G, group_body, win)


def cepstrum_to_mpir(c, cep_order, impulse_response_length):
    """c: (..., M+1) -> h: (..., N), float32 (matches the torch module)."""
    M = cep_order
    N = impulse_response_length
    assert M >= 0 and N >= 1
    assert c.shape[-1] == M + 1, "dimension of cepstrum must be M+1"

    lead = c.shape[:-1]
    B = 1
    for d in lead:
        B *= d

    Mp = _round_up(max(M, 1), 8)   # padded window length (sublane multiple)
    Np = _round_up(N, 8)           # padded output length (groups of 8 rows)

    # ---- lane (batch) tiling: multiples of 128, bounded VMEM per tile -----
    TB = min(512, _round_up(B, 128))
    while TB > 128 and (Np + 8 * Mp) * TB * 4 > (8 << 20):
        TB -= 128
    Bp = _round_up(B, TB)

    cf = c.reshape(B, M + 1).astype(jnp.float32)
    c0 = cf[:, :1]                                               # (B, 1)

    if M >= 1:
        ramp = jnp.arange(1, M + 1, dtype=jnp.float32)
        c1 = (cf[:, 1:] * ramp)[:, ::-1]                         # c1[i] = (M-i)*c[M-i]
    else:
        c1 = jnp.zeros((B, 0), jnp.float32)
    c1p = jnp.pad(c1, ((0, 0), (Mp - M, 0)))                     # (B, Mp), leading zeros

    # 8 pre-shifted copies: c1s[:, s*Mp + k] = c1p[k - s] (0 for k < s)
    c1s = jnp.concatenate(
        [jnp.pad(c1p[:, :Mp - s], ((0, 0), (s, 0))) for s in range(8)], axis=1)

    def to_tb(x):  # (B, D) -> (D, Bp), zero-padded lanes (exp(0)=1: finite, unused)
        if Bp > B:
            x = jnp.pad(x, ((0, Bp - B), (0, 0)))
        return x.T

    c0_t = to_tb(c0)                                             # (1, Bp)
    c1s_t = to_tb(c1s)                                           # (8*Mp, Bp)

    # Precomputed 1/n table (invn[0] is a dummy, never used).
    invn = 1.0 / jnp.maximum(jnp.arange(Np, dtype=jnp.float32), 1.0)

    tile_bytes = (Np + 8 * Mp + 1) * TB * 4
    vmem_limit = int(min(max(2 * tile_bytes + (4 << 20), 32 << 20), 56 << 20))

    kernel = functools.partial(_c2mpir_kernel, Mp=Mp, Np=Np, TB=TB)
    h_t = pl.pallas_call(
        kernel,
        out_shape=jax.ShapeDtypeStruct((Np, Bp), jnp.float32),
        grid=(Bp // TB,),
        in_specs=[
            pl.BlockSpec(memory_space=pltpu.MemorySpace.SMEM),   # 1/n table
            pl.BlockSpec((1, TB), lambda i: (0, i)),             # c[0]
            pl.BlockSpec((8 * Mp, TB), lambda i: (0, i)),        # shifted c1
        ],
        out_specs=pl.BlockSpec((Np, TB), lambda i: (0, i)),
        compiler_params=pltpu.CompilerParams(
            dimension_semantics=("parallel",),
            vmem_limit_bytes=vmem_limit,
        ),
    )(invn, c0_t, c1s_t)

    # TODO(synk): for very large N the (Np, TB) output block could additionally
    # be tiled along time (window carried in a persistent VMEM scratch).
    return h_t[:N, :B].T.reshape(*lead, N)


def _ref_c2mpir(c, cep_order, impulse_response_length):
    """Pure-JAX reference mirroring the PyTorch loop (for verification)."""
    M = cep_order
    N = impulse_response_length
    c = c.astype(jnp.float32)
    c0 = c[..., 0]
    hs = [jnp.exp(c0)]
    if M >= 1:
        ramp = jnp.arange(1, M + 1, dtype=jnp.float32)
        c1 = (c[..., 1:] * ramp)[..., ::-1]
    for n in range(1, N):
        if M >= 1:
            s = n - M
            hw = jnp.stack(hs[max(0, s):n], axis=-1)
            h_n = jnp.sum(hw * c1[..., max(0, -s):], axis=-1) / n
        else:
            h_n = jnp.zeros_like(c0)
        hs.append(h_n)
    return jnp.stack(hs, axis=-1)


if __name__ == "__main__":
    # Main test: M=7 (cepstrum dim 8), N=16, batch (2, 4) -> B = 8.
    cep_order = 7
    impulse_response_length = 16
    batch = (2, 4)

    key = jax.random.PRNGKey(0)
    c = 0.2 * jax.random.normal(key, (*batch, cep_order + 1), dtype=jnp.float32)

    h = cepstrum_to_mpir(c, cep_order, impulse_response_length)
    h = jax.block_until_ready(h)

    h_ref = _ref_c2mpir(c, cep_order, impulse_response_length)
    assert h.shape == (*batch, impulse_response_length)
    assert jnp.allclose(h, h_ref, rtol=1e-5, atol=1e-5), "mismatch vs reference"

    # Doc example from the SPTK page: c = ramp(3), M=3, N=5.
    c_doc = jnp.arange(4, dtype=jnp.float32)
    h_doc = jax.block_until_ready(cepstrum_to_mpir(c_doc, 3, 5))
    expected = jnp.array([1.0, 1.0, 2.5, 5.1666667, 6.0416667], jnp.float32)
    assert jnp.allclose(h_doc, expected, rtol=1e-4, atol=1e-4), "doc example mismatch"

    print("KERNEL_OK")
</pallas_src>

<mosaic_0001>
module attributes {stable_mosaic.version = 11 : i64} {
  func.func @_c2mpir_kernel(%arg0: i32, %arg1: memref<16xf32, #tpu.memory_space<smem>>, %arg2: memref<1x128xf32, #tpu.memory_space<vmem>>, %arg3: memref<64x128xf32, #tpu.memory_space<vmem>>, %arg4: memref<16x128xf32, #tpu.memory_space<vmem>>) attributes {dimension_semantics = [#tpu.dimension_semantics<parallel>], iteration_bounds = array<i64: 1>, scalar_prefetch = 0 : i64, scratch_operands = 0 : i64, tpu.core_type = #tpu.core_type<tc>, window_params = [{transform_indices = @transform_0, window_bounds = array<i64: 16>}, {transform_indices = @transform_1, window_bounds = array<i64: 1, 128>}, {transform_indices = @transform_2, window_bounds = array<i64: 64, 128>}, {transform_indices = @transform_3, window_bounds = array<i64: 16, 128>}]} {
    %c0 = arith.constant 0 : index
    %c0_0 = arith.constant 0 : index
    %0 = vector.load %arg2[%c0, %c0_0] : memref<1x128xf32, #tpu.memory_space<vmem>>, vector<1x128xf32>
    %1 = math.exp %0 : vector<1x128xf32>
    %c7 = arith.constant 7 : index
    %c0_1 = arith.constant 0 : index
    %2 = vector.load %arg3[%c7, %c0_1] : memref<64x128xf32, #tpu.memory_space<vmem>>, vector<1x128xf32>
    %3 = arith.mulf %1, %2 : vector<1x128xf32>
    %c1 = arith.constant 1 : index
    %4 = memref.load %arg1[%c1] : memref<16xf32, #tpu.memory_space<smem>>
    %5 = vector.broadcast %4 : f32 to vector<1x128xf32>
    %6 = arith.mulf %3, %5 : vector<1x128xf32>
    %c7_2 = arith.constant 7 : index
    %c0_3 = arith.constant 0 : index
    %7 = vector.load %arg3[%c7_2, %c0_3] : memref<64x128xf32, #tpu.memory_space<vmem>>, vector<1x128xf32>
    %8 = arith.mulf %6, %7 : vector<1x128xf32>
    %c6 = arith.constant 6 : index
    %c0_4 = arith.constant 0 : index
    %9 = vector.load %arg3[%c6, %c0_4] : memref<64x128xf32, #tpu.memory_space<vmem>>, vector<1x128xf32>
    %10 = arith.mulf %1, %9 : vector<1x128xf32>
    %11 = arith.addf %8, %10 : vector<1x128xf32>
    %c2 = arith.constant 2 : index
    %12 = memref.load %arg1[%c2] : memref<16xf32, #tpu.memory_space<smem>>
    %13 = vector.broadcast %12 : f32 to vector<1x128xf32>
    %14 = arith.mulf %11, %13 : vector<1x128xf32>
    %c7_5 = arith.constant 7 : index
    %c0_6 = arith.constant 0 : index
    %15 = vector.load %arg3[%c7_5, %c0_6] : memref<64x128xf32, #tpu.memory_space<vmem>>, vector<1x128xf32>
    %16 = arith.mulf %14, %15 : vector<1x128xf32>
    %c6_7 = arith.constant 6 : index
    %c0_8 = arith.constant 0 : index
    %17 = vector.load %arg3[%c6_7, %c0_8] : memref<64x128xf32, #tpu.memory_space<vmem>>, vector<1x128xf32>
    %18 = arith.mulf %6, %17 : vector<1x128xf32>
    %c5 = arith.constant 5 : index
    %c0_9 = arith.constant 0 : index
    %19 = vector.load %arg3[%c5, %c0_9] : memref<64x128xf32, #tpu.memory_space<vmem>>, vector<1x128xf32>
    %20 = arith.mulf %1, %19 : vector<1x128xf32>
    %21 = arith.addf %16, %18 : vector<1x128xf32>
    %22 = arith.addf %21, %20 : vector<1x128xf32>
    %c3 = arith.constant 3 : index
    %23 = memref.load %arg1[%c3] : memref<16xf32, #tpu.memory_space<smem>>
    %24 = vector.broadcast %23 : f32 to vector<1x128xf32>
    %25 = arith.mulf %22, %24 : vector<1x128xf32>
    %c7_10 = arith.constant 7 : index
    %c0_11 = arith.constant 0 : index
    %26 = vector.load %arg3[%c7_10, %c0_11] : memref<64x128xf32, #tpu.memory_space<vmem>>, vector<1x128xf32>
    %27 = arith.mulf %25, %26 : vector<1x128xf32>
    %c6_12 = arith.constant 6 : index
    %c0_13 = arith.constant 0 : index
    %28 = vector.load %arg3[%c6_12, %c0_13] : memref<64x128xf32, #tpu.memory_space<vmem>>, vector<1x128xf32>
    %29 = arith.mulf %14, %28 : vector<1x128xf32>
    %c5_14 = arith.constant 5 : index
    %c0_15 = arith.constant 0 : index
    %30 = vector.load %arg3[%c5_14, %c0_15] : memref<64x128xf32, #tpu.memory_space<vmem>>, vector<1x128xf32>
    %31 = arith.mulf %6, %30 : vector<1x128xf32>
    %c4 = arith.constant 4 : index
    %c0_16 = arith.constant 0 : index
    %32 = vector.load %arg3[%c4, %c0_16] : memref<64x128xf32, #tpu.memory_space<vmem>>, vector<1x128xf32>
    %33 = arith.mulf %1, %32 : vector<1x128xf32>
    %34 = arith.addf %27, %29 : vector<1x128xf32>
    %35 = arith.addf %34, %31 : vector<1x128xf32>
    %36 = arith.addf %35, %33 : vector<1x128xf32>
    %c4_17 = arith.constant 4 : index
    %37 = memref.load %arg1[%c4_17] : memref<16xf32, #tpu.memory_space<smem>>
    %38 = vector.broadcast %37 : f32 to vector<1x128xf32>
    %39 = arith.mulf %36, %38 : vector<1x128xf32>
    %c7_18 = arith.constant 7 : index
    %c0_19 = arith.constant 0 : index
    %40 = vector.load %arg3[%c7_18, %c0_19] : memref<64x128xf32, #tpu.memory_space<vmem>>, vector<1x128xf32>
    %41 = arith.mulf %39, %40 : vector<1x128xf32>
    %c6_20 = arith.constant 6 : index
    %c0_21 = arith.constant 0 : index
    %42 = vector.load %arg3[%c6_20, %c0_21] : memref<64x128xf32, #tpu.memory_space<vmem>>, vector<1x128xf32>
    %43 = arith.mulf %25, %42 : vector<1x128xf32>
    %c5_22 = arith.constant 5 : index
    %c0_23 = arith.constant 0 : index
    %44 = vector.load %arg3[%c5_22, %c0_23] : memref<64x128xf32, #tpu.memory_space<vmem>>, vector<1x128xf32>
    %45 = arith.mulf %14, %44 : vector<1x128xf32>
    %c4_24 = arith.constant 4 : index
    %c0_25 = arith.constant 0 : index
    %46 = vector.load %arg3[%c4_24, %c0_25] : memref<64x128xf32, #tpu.memory_space<vmem>>, vector<1x128xf32>
    %47 = arith.mulf %6, %46 : vector<1x128xf32>
    %c3_26 = arith.constant 3 : index
    %c0_27 = arith.constant 0 : index
    %48 = vector.load %arg3[%c3_26, %c0_27] : memref<64x128xf32, #tpu.memory_space<vmem>>, vector<1x128xf32>
    %49 = arith.mulf %1, %48 : vector<1x128xf32>
    %50 = arith.addf %41, %43 : vector<1x128xf32>
    %51 = arith.addf %50, %45 : vector<1x128xf32>
    %52 = arith.addf %51, %47 : vector<1x128xf32>
    %53 = arith.addf %52, %49 : vector<1x128xf32>
    %c5_28 = arith.constant 5 : index
    %54 = memref.load %arg1[%c5_28] : memref<16xf32, #tpu.memory_space<smem>>
    %55 = vector.broadcast %54 : f32 to vector<1x128xf32>
    %56 = arith.mulf %53, %55 : vector<1x128xf32>
    %c7_29 = arith.constant 7 : index
    %c0_30 = arith.constant 0 : index
    %57 = vector.load %arg3[%c7_29, %c0_30] : memref<64x128xf32, #tpu.memory_space<vmem>>, vector<1x128xf32>
    %58 = arith.mulf %56, %57 : vector<1x128xf32>
    %c6_31 = arith.constant 6 : index
    %c0_32 = arith.constant 0 : index
    %59 = vector.load %arg3[%c6_31, %c0_32] : memref<64x128xf32, #tpu.memory_space<vmem>>, vector<1x128xf32>
    %60 = arith.mulf %39, %59 : vector<1x128xf32>
    %c5_33 = arith.constant 5 : index
    %c0_34 = arith.constant 0 : index
    %61 = vector.load %arg3[%c5_33, %c0_34] : memref<64x128xf32, #tpu.memory_space<vmem>>, vector<1x128xf32>
    %62 = arith.mulf %25, %61 : vector<1x128xf32>
    %c4_35 = arith.constant 4 : index
    %c0_36 = arith.constant 0 : index
    %63 = vector.load %arg3[%c4_35, %c0_36] : memref<64x128xf32, #tpu.memory_space<vmem>>, vector<1x128xf32>
    %64 = arith.mulf %14, %63 : vector<1x128xf32>
    %c3_37 = arith.constant 3 : index
    %c0_38 = arith.constant 0 : index
    %65 = vector.load %arg3[%c3_37, %c0_38] : memref<64x128xf32, #tpu.memory_space<vmem>>, vector<1x128xf32>
    %66 = arith.mulf %6, %65 : vector<1x128xf32>
    %c2_39 = arith.constant 2 : index
    %c0_40 = arith.constant 0 : index
    %67 = vector.load %arg3[%c2_39, %c0_40] : memref<64x128xf32, #tpu.memory_space<vmem>>, vector<1x128xf32>
    %68 = arith.mulf %1, %67 : vector<1x128xf32>
    %69 = arith.addf %58, %60 : vector<1x128xf32>
    %70 = arith.addf %69, %62 : vector<1x128xf32>
    %71 = arith.addf %70, %64 : vector<1x128xf32>
    %72 = arith.addf %71, %66 : vector<1x128xf32>
    %73 = arith.addf %72, %68 : vector<1x128xf32>
    %c6_41 = arith.constant 6 : index
    %74 = memref.load %arg1[%c6_41] : memref<16xf32, #tpu.memory_space<smem>>
    %75 = vector.broadcast %74 : f32 to vector<1x128xf32>
    %76 = arith.mulf %73, %75 : vector<1x128xf32>
    %c7_42 = arith.constant 7 : index
    %c0_43 = arith.constant 0 : index
    %77 = vector.load %arg3[%c7_42, %c0_43] : memref<64x128xf32, #tpu.memory_space<vmem>>, vector<1x128xf32>
    %78 = arith.mulf %76, %77 : vector<1x128xf32>
    %c6_44 = arith.constant 6 : index
    %c0_45 = arith.constant 0 : index
    %79 = vector.load %arg3[%c6_44, %c0_45] : memref<64x128xf32, #tpu.memory_space<vmem>>, vector<1x128xf32>
    %80 = arith.mulf %56, %79 : vector<1x128xf32>
    %c5_46 = arith.constant 5 : index
    %c0_47 = arith.constant 0 : index
    %81 = vector.load %arg3[%c5_46, %c0_47] : memref<64x128xf32, #tpu.memory_space<vmem>>, vector<1x128xf32>
    %82 = arith.mulf %39, %81 : vector<1x128xf32>
    %c4_48 = arith.constant 4 : index
    %c0_49 = arith.constant 0 : index
    %83 = vector.load %arg3[%c4_48, %c0_49] : memref<64x128xf32, #tpu.memory_space<vmem>>, vector<1x128xf32>
    %84 = arith.mulf %25, %83 : vector<1x128xf32>
    %c3_50 = arith.constant 3 : index
    %c0_51 = arith.constant 0 : index
    %85 = vector.load %arg3[%c3_50, %c0_51] : memref<64x128xf32, #tpu.memory_space<vmem>>, vector<1x128xf32>
    %86 = arith.mulf %14, %85 : vector<1x128xf32>
    %c2_52 = arith.constant 2 : index
    %c0_53 = arith.constant 0 : index
    %87 = vector.load %arg3[%c2_52, %c0_53] : memref<64x128xf32, #tpu.memory_space<vmem>>, vector<1x128xf32>
    %88 = arith.mulf %6, %87 : vector<1x128xf32>
    %c1_54 = arith.constant 1 : index
    %c0_55 = arith.constant 0 : index
    %89 = vector.load %arg3[%c1_54, %c0_55] : memref<64x128xf32, #tpu.memory_space<vmem>>, vector<1x128xf32>
    %90 = arith.mulf %1, %89 : vector<1x128xf32>
    %91 = arith.addf %78, %80 : vector<1x128xf32>
    %92 = arith.addf %91, %82 : vector<1x128xf32>
    %93 = arith.addf %92, %84 : vector<1x128xf32>
    %94 = arith.addf %93, %86 : vector<1x128xf32>
    %95 = arith.addf %94, %88 : vector<1x128xf32>
    %96 = arith.addf %95, %90 : vector<1x128xf32>
    %c7_56 = arith.constant 7 : index
    %97 = memref.load %arg1[%c7_56] : memref<16xf32, #tpu.memory_space<smem>>
    %98 = vector.broadcast %97 : f32 to vector<1x128xf32>
    %99 = arith.mulf %96, %98 : vector<1x128xf32>
    %100 = tpu.concatenate %1, %6, %14, %25, %39, %56, %76, %99 in 0 : vector<1x128xf32>, vector<1x128xf32>, vector<1x128xf32>, vector<1x128xf32>, vector<1x128xf32>, vector<1x128xf32>, vector<1x128xf32>, vector<1x128xf32> -> vector<8x128xf32>
    %c0_57 = arith.constant 0 : index
    %c0_58 = arith.constant 0 : index
    %101 = vector.load %arg4[%c0_57, %c0_58] : memref<16x128xf32, #tpu.memory_space<vmem>>, vector<8x128xf32>
    tpu.vector_store %arg4[%c0_57, %c0_58], %100 {strides = array<i32>} : memref<16x128xf32, #tpu.memory_space<vmem>>, vector<8x128xf32>,
    %c1_i32 = arith.constant 1 : i32
    %c8_i32 = arith.constant 8 : i32
    %102 = arith.muli %c1_i32, %c8_i32 : i32
    %103 = tpu.assume_multiple %102, 8 : i32
    %c0_i32 = arith.constant 0 : i32
    %104 = arith.addi %103, %c0_i32 : i32
    %c0_59 = arith.constant 0 : index
    %c0_60 = arith.constant 0 : index
    %105 = vector.load %arg3[%c0_59, %c0_60] : memref<64x128xf32, #tpu.memory_space<vmem>>, vector<8x128xf32>
    %106 = arith.mulf %100, %105 : vector<8x128xf32>
    %cst = arith.constant dense<0.000000e+00> : vector<128xf32>
    %107 = vector.multi_reduction <add>, %106, %cst [0] : vector<8x128xf32> to vector<128xf32>
    %108 = vector.shape_cast %107 : vector<128xf32> to vector<1x128xf32>
    %109 = arith.index_cast %104 : i32 to index
    %110 = memref.load %arg1[%109] : memref<16xf32, #tpu.memory_space<smem>>
    %111 = vector.broadcast %110 : f32 to vector<1x128xf32>
    %112 = arith.mulf %108, %111 : vector<1x128xf32>
    %c1_i32_61 = arith.constant 1 : i32
    %113 = arith.addi %103, %c1_i32_61 : i32
    %c8 = arith.constant 8 : index
    %c0_62 = arith.constant 0 : index
    %114 = vector.load %arg3[%c8, %c0_62] : memref<64x128xf32, #tpu.memory_space<vmem>>, vector<8x128xf32>
    %115 = arith.mulf %100, %114 : vector<8x128xf32>
    %cst_63 = arith.constant dense<0.000000e+00> : vector<128xf32>
    %116 = vector.multi_reduction <add>, %115, %cst_63 [0] : vector<8x128xf32> to vector<128xf32>
    %117 = vector.shape_cast %116 : vector<128xf32> to vector<1x128xf32>
    %c7_64 = arith.constant 7 : index
    %c0_65 = arith.constant 0 : index
    %118 = vector.load %arg3[%c7_64, %c0_65] : memref<64x128xf32, #tpu.memory_space<vmem>>, vector<1x128xf32>
    %119 = arith.mulf %112, %118 : vector<1x128xf32>
    %120 = arith.addf %117, %119 : vector<1x128xf32>
    %121 = arith.index_cast %113 : i32 to index
    %122 = memref.load %arg1[%121] : memref<16xf32, #tpu.memory_space<smem>>
    %123 = vector.broadcast %122 : f32 to vector<1x128xf32>
    %124 = arith.mulf %120, %123 : vector<1x128xf32>
    %c2_i32 = arith.constant 2 : i32
    %125 = arith.addi %103, %c2_i32 : i32
    %c16 = arith.constant 16 : index
    %c0_66 = arith.constant 0 : index
    %126 = vector.load %arg3[%c16, %c0_66] : memref<64x128xf32, #tpu.memory_space<vmem>>, vector<8x128xf32>
    %127 = arith.mulf %100, %126 : vector<8x128xf32>
    %cst_67 = arith.constant dense<0.000000e+00> : vector<128xf32>
    %128 = vector.multi_reduction <add>, %127, %cst_67 [0] : vector<8x128xf32> to vector<128xf32>
    %129 = vector.shape_cast %128 : vector<128xf32> to vector<1x128xf32>
    %c7_68 = arith.constant 7 : index
    %c0_69 = arith.constant 0 : index
    %130 = vector.load %arg3[%c7_68, %c0_69] : memref<64x128xf32, #tpu.memory_space<vmem>>, vector<1x128xf32>
    %131 = arith.mulf %124, %130 : vector<1x128xf32>
    %c6_70 = arith.constant 6 : index
    %c0_71 = arith.constant 0 : index
    %132 = vector.load %arg3[%c6_70, %c0_71] : memref<64x128xf32, #tpu.memory_space<vmem>>, vector<1x128xf32>
    %133 = arith.mulf %112, %132 : vector<1x128xf32>
    %134 = arith.addf %129, %131 : vector<1x128xf32>
    %135 = arith.addf %134, %133 : vector<1x128xf32>
    %136 = arith.index_cast %125 : i32 to index
    %137 = memref.load %arg1[%136] : memref<16xf32, #tpu.memory_space<smem>>
    %138 = vector.broadcast %137 : f32 to vector<1x128xf32>
    %139 = arith.mulf %135, %138 : vector<1x128xf32>
    %c3_i32 = arith.constant 3 : i32
    %140 = arith.addi %103, %c3_i32 : i32
    %c24 = arith.constant 24 : index
    %c0_72 = arith.constant 0 : index
    %141 = vector.load %arg3[%c24, %c0_72] : memref<64x128xf32, #tpu.memory_space<vmem>>, vector<8x128xf32>
    %142 = arith.mulf %100, %141 : vector<8x128xf32>
    %cst_73 = arith.constant dense<0.000000e+00> : vector<128xf32>
    %143 = vector.multi_reduction <add>, %142, %cst_73 [0] : vector<8x128xf32> to vector<128xf32>
    %144 = vector.shape_cast %143 : vector<128xf32> to vector<1x128xf32>
    %c7_74 = arith.constant 7 : index
    %c0_75 = arith.constant 0 : index
    %145 = vector.load %arg3[%c7_74, %c0_75] : memref<64x128xf32, #tpu.memory_space<vmem>>, vector<1x128xf32>
    %146 = arith.mulf %139, %145 : vector<1x128xf32>
    %c6_76 = arith.constant 6 : index
    %c0_77 = arith.constant 0 : index
    %147 = vector.load %arg3[%c6_76, %c0_77] : memref<64x128xf32, #tpu.memory_space<vmem>>, vector<1x128xf32>
    %148 = arith.mulf %124, %147 : vector<1x128xf32>
    %c5_78 = arith.constant 5 : index
    %c0_79 = arith.constant 0 : index
    %149 = vector.load %arg3[%c5_78, %c0_79] : memref<64x128xf32, #tpu.memory_space<vmem>>, vector<1x128xf32>
    %150 = arith.mulf %112, %149 : vector<1x128xf32>
    %151 = arith.addf %144, %146 : vector<1x128xf32>
    %152 = arith.addf %151, %148 : vector<1x128xf32>
    %153 = arith.addf %152, %150 : vector<1x128xf32>
    %154 = arith.index_cast %140 : i32 to index
    %155 = memref.load %arg1[%154] : memref<16xf32, #tpu.memory_space<smem>>
    %156 = vector.broadcast %155 : f32 to vector<1x128xf32>
    %157 = arith.mulf %153, %156 : vector<1x128xf32>
    %c4_i32 = arith.constant 4 : i32
    %158 = arith.addi %103, %c4_i32 : i32
    %c32 = arith.constant 32 : index
    %c0_80 = arith.constant 0 : index
    %159 = vector.load %arg3[%c32, %c0_80] : memref<64x128xf32, #tpu.memory_space<vmem>>, vector<8x128xf32>
    %160 = arith.mulf %100, %159 : vector<8x128xf32>
    %cst_81 = arith.constant dense<0.000000e+00> : vector<128xf32>
    %161 = vector.multi_reduction <add>, %160, %cst_81 [0] : vector<8x128xf32> to vector<128xf32>
    %162 = vector.shape_cast %161 : vector<128xf32> to vector<1x128xf32>
    %c7_82 = arith.constant 7 : index
    %c0_83 = arith.constant 0 : index
    %163 = vector.load %arg3[%c7_82, %c0_83] : memref<64x128xf32, #tpu.memory_space<vmem>>, vector<1x128xf32>
    %164 = arith.mulf %157, %163 : vector<1x128xf32>
    %c6_84 = arith.constant 6 : index
    %c0_85 = arith.constant 0 : index
    %165 = vector.load %arg3[%c6_84, %c0_85] : memref<64x128xf32, #tpu.memory_space<vmem>>, vector<1x128xf32>
    %166 = arith.mulf %139, %165 : vector<1x128xf32>
    %c5_86 = arith.constant 5 : index
    %c0_87 = arith.constant 0 : index
    %167 = vector.load %arg3[%c5_86, %c0_87] : memref<64x128xf32, #tpu.memory_space<vmem>>, vector<1x128xf32>
    %168 = arith.mulf %124, %167 : vector<1x128xf32>
    %c4_88 = arith.constant 4 : index
    %c0_89 = arith.constant 0 : index
    %169 = vector.load %arg3[%c4_88, %c0_89] : memref<64x128xf32, #tpu.memory_space<vmem>>, vector<1x128xf32>
    %170 = arith.mulf %112, %169 : vector<1x128xf32>
    %171 = arith.addf %162, %164 : vector<1x128xf32>
    %172 = arith.addf %171, %166 : vector<1x128xf32>
    %173 = arith.addf %172, %168 : vector<1x128xf32>
    %174 = arith.addf %173, %170 : vector<1x128xf32>
    %175 = arith.index_cast %158 : i32 to index
    %176 = memref.load %arg1[%175] : memref<16xf32, #tpu.memory_space<smem>>
    %177 = vector.broadcast %176 : f32 to vector<1x128xf32>
    %178 = arith.mulf %174, %177 : vector<1x128xf32>
    %c5_i32 = arith.constant 5 : i32
    %179 = arith.addi %103, %c5_i32 : i32
    %c40 = arith.constant 40 : index
    %c0_90 = arith.constant 0 : index
    %180 = vector.load %arg3[%c40, %c0_90] : memref<64x128xf32, #tpu.memory_space<vmem>>, vector<8x128xf32>
    %181 = arith.mulf %100, %180 : vector<8x128xf32>
    %cst_91 = arith.constant dense<0.000000e+00> : vector<128xf32>
    %182 = vector.multi_reduction <add>, %181, %cst_91 [0] : vector<8x128xf32> to vector<128xf32>
    %183 = vector.shape_cast %182 : vector<128xf32> to vector<1x128xf32>
    %c7_92 = arith.constant 7 : index
    %c0_93 = arith.constant 0 : index
    %184 = vector.load %arg3[%c7_92, %c0_93] : memref<64x128xf32, #tpu.memory_space<vmem>>, vector<1x128xf32>
    %185 = arith.mulf %178, %184 : vector<1x128xf32>
    %c6_94 = arith.constant 6 : index
    %c0_95 = arith.constant 0 : index
    %186 = vector.load %arg3[%c6_94, %c0_95] : memref<64x128xf32, #tpu.memory_space<vmem>>, vector<1x128xf32>
    %187 = arith.mulf %157, %186 : vector<1x128xf32>
    %c5_96 = arith.constant 5 : index
    %c0_97 = arith.constant 0 : index
    %188 = vector.load %arg3[%c5_96, %c0_97] : memref<64x128xf32, #tpu.memory_space<vmem>>, vector<1x128xf32>
    %189 = arith.mulf %139, %188 : vector<1x128xf32>
    %c4_98 = arith.constant 4 : index
    %c0_99 = arith.constant 0 : index
    %190 = vector.load %arg3[%c4_98, %c0_99] : memref<64x128xf32, #tpu.memory_space<vmem>>, vector<1x128xf32>
    %191 = arith.mulf %124, %190 : vector<1x128xf32>
    %c3_100 = arith.constant 3 : index
    %c0_101 = arith.constant 0 : index
    %192 = vector.load %arg3[%c3_100, %c0_101] : memref<64x128xf32, #tpu.memory_space<vmem>>, vector<1x128xf32>
    %193 = arith.mulf %112, %192 : vector<1x128xf32>
    %194 = arith.addf %183, %185 : vector<1x128xf32>
    %195 = arith.addf %194, %187 : vector<1x128xf32>
    %196 = arith.addf %195, %189 : vector<1x128xf32>
    %197 = arith.addf %196, %191 : vector<1x128xf32>
    %198 = arith.addf %197, %193 : vector<1x128xf32>
    %199 = arith.index_cast %179 : i32 to index
    %200 = memref.load %arg1[%199] : memref<16xf32, #tpu.memory_space<smem>>
    %201 = vector.broadcast %200 : f32 to vector<1x128xf32>
    %202 = arith.mulf %198, %201 : vector<1x128xf32>
    %c6_i32 = arith.constant 6 : i32
    %203 = arith.addi %103, %c6_i32 : i32
    %c48 = arith.constant 48 : index
    %c0_102 = arith.constant 0 : index
    %204 = vector.load %arg3[%c48, %c0_102] : memref<64x128xf32, #tpu.memory_space<vmem>>, vector<8x128xf32>
    %205 = arith.mulf %100, %204 : vector<8x128xf32>
    %cst_103 = arith.constant dense<0.000000e+00> : vector<128xf32>
    %206 = vector.multi_reduction <add>, %205, %cst_103 [0] : vector<8x128xf32> to vector<128xf32>
    %207 = vector.shape_cast %206 : vector<128xf32> to vector<1x128xf32>
    %c7_104 = arith.constant 7 : index
    %c0_105 = arith.constant 0 : index
    %208 = vector.load %arg3[%c7_104, %c0_105] : memref<64x128xf32, #tpu.memory_space<vmem>>, vector<1x128xf32>
    %209 = arith.mulf %202, %208 : vector<1x128xf32>
    %c6_106 = arith.constant 6 : index
    %c0_107 = arith.constant 0 : index
    %210 = vector.load %arg3[%c6_106, %c0_107] : memref<64x128xf32, #tpu.memory_space<vmem>>, vector<1x128xf32>
    %211 = arith.mulf %178, %210 : vector<1x128xf32>
    %c5_108 = arith.constant 5 : index
    %c0_109 = arith.constant 0 : index
    %212 = vector.load %arg3[%c5_108, %c0_109] : memref<64x128xf32, #tpu.memory_space<vmem>>, vector<1x128xf32>
    %213 = arith.mulf %157, %212 : vector<1x128xf32>
    %c4_110 = arith.constant 4 : index
    %c0_111 = arith.constant 0 : index
    %214 = vector.load %arg3[%c4_110, %c0_111] : memref<64x128xf32, #tpu.memory_space<vmem>>, vector<1x128xf32>
    %215 = arith.mulf %139, %214 : vector<1x128xf32>
    %c3_112 = arith.constant 3 : index
    %c0_113 = arith.constant 0 : index
    %216 = vector.load %arg3[%c3_112, %c0_113] : memref<64x128xf32, #tpu.memory_space<vmem>>, vector<1x128xf32>
    %217 = arith.mulf %124, %216 : vector<1x128xf32>
    %c2_114 = arith.constant 2 : index
    %c0_115 = arith.constant 0 : index
    %218 = vector.load %arg3[%c2_114, %c0_115] : memref<64x128xf32, #tpu.memory_space<vmem>>, vector<1x128xf32>
    %219 = arith.mulf %112, %218 : vector<1x128xf32>
    %220 = arith.addf %207, %209 : vector<1x128xf32>
    %221 = arith.addf %220, %211 : vector<1x128xf32>
    %222 = arith.addf %221, %213 : vector<1x128xf32>
    %223 = arith.addf %222, %215 : vector<1x128xf32>
    %224 = arith.addf %223, %217 : vector<1x128xf32>
    %225 = arith.addf %224, %219 : vector<1x128xf32>
    %226 = arith.index_cast %203 : i32 to index
    %227 = memref.load %arg1[%226] : memref<16xf32, #tpu.memory_space<smem>>
    %228 = vector.broadcast %227 : f32 to vector<1x128xf32>
    %229 = arith.mulf %225, %228 : vector<1x128xf32>
    %c7_i32 = arith.constant 7 : i32
    %230 = arith.addi %103, %c7_i32 : i32
    %c56 = arith.constant 56 : index
    %c0_116 = arith.constant 0 : index
    %231 = vector.load %arg3[%c56, %c0_116] : memref<64x128xf32, #tpu.memory_space<vmem>>, vector<8x128xf32>
    %232 = arith.mulf %100, %231 : vector<8x128xf32>
    %cst_117 = arith.constant dense<0.000000e+00> : vector<128xf32>
    %233 = vector.multi_reduction <add>, %232, %cst_117 [0] : vector<8x128xf32> to vector<128xf32>
    %234 = vector.shape_cast %233 : vector<128xf32> to vector<1x128xf32>
    %c7_118 = arith.constant 7 : index
    %c0_119 = arith.constant 0 : index
    %235 = vector.load %arg3[%c7_118, %c0_119] : memref<64x128xf32, #tpu.memory_space<vmem>>, vector<1x128xf32>
    %236 = arith.mulf %229, %235 : vector<1x128xf32>
    %c6_120 = arith.constant 6 : index
    %c0_121 = arith.constant 0 : index
    %237 = vector.load %arg3[%c6_120, %c0_121] : memref<64x128xf32, #tpu.memory_space<vmem>>, vector<1x128xf32>
    %238 = arith.mulf %202, %237 : vector<1x128xf32>
    %c5_122 = arith.constant 5 : index
    %c0_123 = arith.constant 0 : index
    %239 = vector.load %arg3[%c5_122, %c0_123] : memref<64x128xf32, #tpu.memory_space<vmem>>, vector<1x128xf32>
    %240 = arith.mulf %178, %239 : vector<1x128xf32>
    %c4_124 = arith.constant 4 : index
    %c0_125 = arith.constant 0 : index
    %241 = vector.load %arg3[%c4_124, %c0_125] : memref<64x128xf32, #tpu.memory_space<vmem>>, vector<1x128xf32>
    %242 = arith.mulf %157, %241 : vector<1x128xf32>
    %c3_126 = arith.constant 3 : index
    %c0_127 = arith.constant 0 : index
    %243 = vector.load %arg3[%c3_126, %c0_127] : memref<64x128xf32, #tpu.memory_space<vmem>>, vector<1x128xf32>
    %244 = arith.mulf %139, %243 : vector<1x128xf32>
    %c2_128 = arith.constant 2 : index
    %c0_129 = arith.constant 0 : index
    %245 = vector.load %arg3[%c2_128, %c0_129] : memref<64x128xf32, #tpu.memory_space<vmem>>, vector<1x128xf32>
    %246 = arith.mulf %124, %245 : vector<1x128xf32>
    %c1_130 = arith.constant 1 : index
    %c0_131 = arith.constant 0 : index
    %247 = vector.load %arg3[%c1_130, %c0_131] : memref<64x128xf32, #tpu.memory_space<vmem>>, vector<1x128xf32>
    %248 = arith.mulf %112, %247 : vector<1x128xf32>
    %249 = arith.addf %234, %236 : vector<1x128xf32>
    %250 = arith.addf %249, %238 : vector<1x128xf32>
    %251 = arith.addf %250, %240 : vector<1x128xf32>
    %252 = arith.addf %251, %242 : vector<1x128xf32>
    %253 = arith.addf %252, %244 : vector<1x128xf32>
    %254 = arith.addf %253, %246 : vector<1x128xf32>
    %255 = arith.addf %254, %248 : vector<1x128xf32>
    %256 = arith.index_cast %230 : i32 to index
    %257 = memref.load %arg1[%256] : memref<16xf32, #tpu.memory_space<smem>>
    %258 = vector.broadcast %257 : f32 to vector<1x128xf32>
    %259 = arith.mulf %255, %258 : vector<1x128xf32>
    %260 = tpu.concatenate %112, %124, %139, %157, %178, %202, %229, %259 in 0 : vector<1x128xf32>, vector<1x128xf32>, vector<1x128xf32>, vector<1x128xf32>, vector<1x128xf32>, vector<1x128xf32>, vector<1x128xf32>, vector<1x128xf32> -> vector<8x128xf32>
    %261 = arith.index_cast %103 : i32 to index
    %c0_132 = arith.constant 0 : index
    %262 = vector.load %arg4[%261, %c0_132] : memref<16x128xf32, #tpu.memory_space<vmem>>, vector<8x128xf32>
    tpu.vector_store %arg4[%261, %c0_132], %260 {strides = array<i32>} : memref<16x128xf32, #tpu.memory_space<vmem>>, vector<8x128xf32>,
    %c1_i32_133 = arith.constant 1 : i32
    return
  }
  func.func @transform_0(%arg0: i32) -> i32 {
    %c0_i32 = arith.constant 0 : i32
    %c0_i32_0 = arith.constant 0 : i32
    return %c0_i32 : i32
  }
  func.func @transform_1(%arg0: i32) -> (i32, i32) {
    %c0_i32 = arith.constant 0 : i32
    %c0_i32_0 = arith.constant 0 : i32
    return %c0_i32, %arg0 : i32, i32
  }
  func.func @transform_2(%arg0: i32) -> (i32, i32) {
    %c0_i32 = arith.constant 0 : i32
    %c0_i32_0 = arith.constant 0 : i32
    return %c0_i32, %arg0 : i32, i32
  }
  func.func @transform_3(%arg0: i32) -> (i32, i32) {
    %c0_i32 = arith.constant 0 : i32
    %c0_i32_0 = arith.constant 0 : i32
    return %c0_i32, %arg0 : i32, i32
  }
}

</mosaic_0001>

<llo_original>
// kernel: tpu_custom_call.1
$region0: #{tpu_custom_call.1}
  #allocation0 [shape = 'u32[]', space=smem, size = 0x4, offset = 0x4, fixed_abs, tag = 'smem constant byte address 0x4 - core index']
  #allocation1 [shape = 'u32[144,128]{1,0:T(1,128)}', space=vmem, size = 0x12000, scoped, tag = 'internal scratch']
  %s0 = inlined_call_operand.hbm [shape: f32[16], index: 0, kind: input, shape index: {}]
  %s1 = inlined_call_operand.vmem [shape: f32[1,128], index: 1, kind: input, shape index: {}]
  %s2 = inlined_call_operand.hbm [shape: f32[64,128], index: 2, kind: input, shape index: {}]
  %s3 = inlined_call_operand.hbm [shape: f32[16,128], index: 3, kind: output, shape index: {}]
  %s4 = sld [smem:[#allocation0]]
  $region30: #{tpu_custom_call.1} parent=0
    _
  %s6 = ssub.s32 1, %s4
  %s7 = scalar_select 0, %s6, %s4
  $region1: #{tpu_custom_call.1} parent=0
    #allocation2 [shape = 'u8[512]{0}', space=smem, size = 0x200, scoped, tag = 'input window, operand 0, single buffered']
    #allocation3 [shape = 's32[1]{0}', space=sflag, size = 0x4, scoped, tag = 'scoped memory for tpu_custom_call.1']
    #allocation4 [shape = 's32[1]{0}', space=sflag, size = 0x4, scoped, tag = 'scoped memory for tpu_custom_call.1']
    #allocation5 [shape = 's32[1]{0}', space=sflag, size = 0x4, scoped, tag = 'scoped memory for tpu_custom_call.1']
    #allocation6 [shape = 'u8[32768]{0}', space=vmem, size = 0x8000, scoped, tag = 'input window, operand 2, single buffered']
    #allocation7 [shape = 'u8[8192]{0}', space=vmem, size = 0x2000, scoped, tag = 'output window, operand 0, single buffered']
    %8 = vsyncpa [#allocation5], 0
    %9 = vsyncpa [#allocation3], 0
    %10 = vsyncpa [#allocation4], 0
    // Predicated region
    $region2: #{tpu_custom_call.1} parent=1 // pred_check
      _
    $region3: #{tpu_custom_call.1} parent=1 // pred_check_branch
      %12 = sbr.rel (0) target = $region5
    $region4: #{tpu_custom_call.1} parent=1 // pred_region
      %s14 = ssub.s32 16, 16
      %15 = vsyncadd [#allocation5], %s14
      %18 = dma.hbm_to_smem %s0, 16, [#allocation2], [#allocation5]
    $region5: #{tpu_custom_call.1} parent=1 // pred_fallthru
      _
    // Predicated region
    $region6: #{tpu_custom_call.1} parent=1 // pred_check
      _
    $region7: #{tpu_custom_call.1} parent=1 // pred_check_branch
      %20 = sbr.rel (0) target = $region9
    $region8: #{tpu_custom_call.1} parent=1 // pred_region
      _
    $region9: #{tpu_custom_call.1} parent=1 // pred_fallthru
      _
    // Predicated region
    $region10: #{tpu_custom_call.1} parent=1 // pred_check
      _
    $region11: #{tpu_custom_call.1} parent=1 // pred_check_branch
      %22 = sbr.rel (0) target = $region13
    $region12: #{tpu_custom_call.1} parent=1 // pred_region
      %s24 = ssub.s32 1024, 1024
      %25 = vsyncadd [#allocation3], %s24
      %s26 = sshll.u32 [#allocation6], 4
      %s27 = int_to_ptr.vmem [resolvable:$true] %s26
      %32 = dma.hbm_to_vmem [thread:$0]  %s2, 1024, %s27, [#allocation3], 128, 128, 8
    $region13: #{tpu_custom_call.1} parent=1 // pred_fallthru
      _
    // Predicated region
    $region14: #{tpu_custom_call.1} parent=1 // pred_check
      _
    $region15: #{tpu_custom_call.1} parent=1 // pred_check_branch
      %34 = sbr.rel (0) target = $region17
    $region16: #{tpu_custom_call.1} parent=1 // pred_region
      %35 = dma.done [#allocation5], 16
    $region17: #{tpu_custom_call.1} parent=1 // pred_fallthru
      _
    // Predicated region
    $region18: #{tpu_custom_call.1} parent=1 // pred_check
      _
    $region19: #{tpu_custom_call.1} parent=1 // pred_check_branch
      %37 = sbr.rel (0) target = $region21
    $region20: #{tpu_custom_call.1} parent=1 // pred_region
      %38 = dma.done [#allocation3], 1024
    $region21: #{tpu_custom_call.1} parent=1 // pred_fallthru
      _
    %39 = sfence
    %v40 = vld [vmem:[%s1] sm:$0x1]
    %v41 = vmul.f32 %v40, 1.442695
    %v42 = vpow.pop %v41
    %v43 = vld [vmem:[#allocation6 + $0x7] sm:$0x1]
    %v44 = vmul.f32 %v42, %v43
    %s45 = sld [smem:[#allocation2 + $0x1]]
    %v46 = vstv %s45
    %v47 = vmul.f32 %v44, %v46
    %v48 = vmul.f32 %v47, %v43
    %v49 = vld [vmem:[#allocation6 + $0x6] sm:$0x1]
    %v50 = vmul.f32 %v42, %v49
    %v51 = vadd.f32 %v48, %v50
    %s52 = sld [smem:[#allocation2 + $0x2]]
    %v53 = vstv %s52
    %v54 = vmul.f32 %v51, %v53
    %v55 = vmul.f32 %v54, %v43
    %v56 = vmul.f32 %v47, %v49
    %v57 = vld [vmem:[#allocation6 + $0x5] sm:$0x1]
    %v58 = vmul.f32 %v42, %v57
    %v59 = vadd.f32 %v55, %v56
    %v60 = vadd.f32 %v59, %v58
    %s61 = sld [smem:[#allocation2 + $0x3]]
    %v62 = vstv %s61
    %v63 = vmul.f32 %v60, %v62
    %v64 = vmul.f32 %v63, %v43
    %v65 = vmul.f32 %v54, %v49
    %v66 = vmul.f32 %v47, %v57
    %v67 = vld [vmem:[#allocation6 + $0x4] sm:$0x1]
    %v68 = vmul.f32 %v42, %v67
    %v69 = vadd.f32 %v64, %v65
    %v70 = vadd.f32 %v69, %v66
    %v71 = vadd.f32 %v70, %v68
    %s72 = sld [smem:[#allocation2 + $0x4]]
    %v73 = vstv %s72
    %v74 = vmul.f32 %v71, %v73
    %v75 = vmul.f32 %v74, %v43
    %v76 = vmul.f32 %v63, %v49
    %v77 = vmul.f32 %v54, %v57
    %v78 = vmul.f32 %v47, %v67
    %v79 = vld [vmem:[#allocation6 + $0x3] sm:$0x1]
    %v80 = vmul.f32 %v42, %v79
    %v81 = vadd.f32 %v75, %v76
    %v82 = vadd.f32 %v81, %v77
    %v83 = vadd.f32 %v82, %v78
    %v84 = vadd.f32 %v83, %v80
    %s85 = sld [smem:[#allocation2 + $0x5]]
    %v86 = vstv %s85
    %v87 = vmul.f32 %v84, %v86
    %v88 = vmul.f32 %v87, %v43
    %v89 = vmul.f32 %v74, %v49
    %v90 = vmul.f32 %v63, %v57
    %v91 = vmul.f32 %v54, %v67
    %v92 = vmul.f32 %v47, %v79
    %v93 = vld [vmem:[#allocation6 + $0x2] sm:$0x1]
    %v94 = vmul.f32 %v42, %v93
    %v95 = vadd.f32 %v88, %v89
    %v96 = vadd.f32 %v95, %v90
    %v97 = vadd.f32 %v96, %v91
    %v98 = vadd.f32 %v97, %v92
    %v99 = vadd.f32 %v98, %v94
    %s100 = sld [smem:[#allocation2 + $0x6]]
    %v101 = vstv %s100
    %v102 = vmul.f32 %v99, %v101
    %v103 = vmul.f32 %v102, %v43
    %v104 = vmul.f32 %v87, %v49
    %v105 = vmul.f32 %v74, %v57
    %v106 = vmul.f32 %v63, %v67
    %v107 = vmul.f32 %v54, %v79
    %v108 = vmul.f32 %v47, %v93
    %v109 = vld [vmem:[#allocation6 + $0x1] sm:$0x1]
    %v110 = vmul.f32 %v42, %v109
    %v111 = vadd.f32 %v103, %v104
    %v112 = vadd.f32 %v111, %v105
    %v113 = vadd.f32 %v112, %v106
    %v114 = vadd.f32 %v113, %v107
    %v115 = vadd.f32 %v114, %v108
    %v116 = vadd.f32 %v115, %v110
    %s117 = sld [smem:[#allocation2 + $0x7]]
    %v118 = vstv %s117
    %v119 = vmul.f32 %v116, %v118
    %v121 = vlaneseq
    %v122 = vshrl.u32 %v121, 7
    %v123 = vsub.s32 0, %v122
    %v124 = vrot.slane %v47, %v123
    %v127 = vlaneseq
    %v128 = vshrl.u32 %v127, 7
    %v129 = vsub.s32 0, %v128
    %v130 = vrot.slane %v54, %v129
    %v133 = vlaneseq
    %v134 = vshrl.u32 %v133, 7
    %v135 = vsub.s32 0, %v134
    %v136 = vrot.slane %v63, %v135
    %v139 = vlaneseq
    %v140 = vshrl.u32 %v139, 7
    %v141 = vsub.s32 0, %v140
    %v142 = vrot.slane %v74, %v141
    %v145 = vlaneseq
    %v146 = vshrl.u32 %v145, 7
    %v147 = vsub.s32 0, %v146
    %v148 = vrot.slane %v87, %v147
    %v151 = vlaneseq
    %v152 = vshrl.u32 %v151, 7
    %v153 = vsub.s32 0, %v152
    %v154 = vrot.slane %v102, %v153
    %v157 = vlaneseq
    %v158 = vshrl.u32 %v157, 7
    %v159 = vsub.s32 0, %v158
    %v160 = vrot.slane %v119, %v159
    %vm162 = vcmask 1040384
    %v163 = vsel %vm162, %v42, %v124
    %vm164 = vcmask 1041408
    %v165 = vsel %vm164, %v163, %v130
    %vm166 = vcmask 1042432
    %v167 = vsel %vm166, %v165, %v136
    %vm168 = vcmask 1043456
    %v169 = vsel %vm168, %v167, %v142
    %vm170 = vcmask 1044480
    %v171 = vsel %vm170, %v169, %v148
    %vm172 = vcmask 1045504
    %v173 = vsel %vm172, %v171, %v154
    %vm174 = vcmask 1046528
    %v175 = vsel %vm174, %v173, %v160
    %176 = vst [vmem:[#allocation7] sm:$0xff] %v175
    %v177 = vld [vmem:[#allocation6] sm:$0xff]
    %v178 = vmul.f32 %v175, %v177
    %v179 = vrot.slane %v178, 4
    %v180 = vadd.f32 %v178, %v179
    %v181 = vrot.slane %v180, 2
    %v182 = vadd.f32 %v180, %v181
    %v183 = vrot.slane %v182, 1
    %v184 = vadd.f32 %v182, %v183
    %s185 = sld [smem:[#allocation2 + $0x8]]
    %v186 = vstv %s185
    %v187 = vmul.f32 %v184, %v186
    %s188 = sadd.s32 8, 1
    %v189 = vld [vmem:[#allocation6 + $0x8] sm:$0xff]
    %v190 = vmul.f32 %v175, %v189
    %v191 = vrot.slane %v190, 4
    %v192 = vadd.f32 %v190, %v191
    %v193 = vrot.slane %v192, 2
    %v194 = vadd.f32 %v192, %v193
    %v195 = vrot.slane %v194, 1
    %v196 = vadd.f32 %v194, %v195
    %v197 = vld [vmem:[#allocation6 + $0x7] sm:$0x1]
    %v198 = vmul.f32 %v187, %v197
    %v199 = vadd.f32 %v196, %v198
    %s200 = sld [smem:[#allocation2 + %s188]]
    %v201 = vstv %s200
    %v202 = vmul.f32 %v199, %v201
    %s203 = sadd.s32 8, 2
    %v204 = vld [vmem:[#allocation6 + $0x10] sm:$0xff]
    %v205 = vmul.f32 %v175, %v204
    %v206 = vrot.slane %v205, 4
    %v207 = vadd.f32 %v205, %v206
    %v208 = vrot.slane %v207, 2
    %v209 = vadd.f32 %v207, %v208
    %v210 = vrot.slane %v209, 1
    %v211 = vadd.f32 %v209, %v210
    %v212 = vmul.f32 %v202, %v197
    %v213 = vld [vmem:[#allocation6 + $0x6] sm:$0x1]
    %v214 = vmul.f32 %v187, %v213
    %v215 = vadd.f32 %v211, %v212
    %v216 = vadd.f32 %v215, %v214
    %s217 = sld [smem:[#allocation2 + %s203]]
    %v218 = vstv %s217
    %v219 = vmul.f32 %v216, %v218
    %s220 = sadd.s32 8, 3
    %v221 = vld [vmem:[#allocation6 + $0x18] sm:$0xff]
    %v222 = vmul.f32 %v175, %v221
    %v223 = vrot.slane %v222, 4
    %v224 = vadd.f32 %v222, %v223
    %v225 = vrot.slane %v224, 2
    %v226 = vadd.f32 %v224, %v225
    %v227 = vrot.slane %v226, 1
    %v228 = vadd.f32 %v226, %v227
    %v229 = vmul.f32 %v219, %v197
    %v230 = vmul.f32 %v202, %v213
    %v231 = vld [vmem:[#allocation6 + $0x5] sm:$0x1]
    %v232 = vmul.f32 %v187, %v231
    %v233 = vadd.f32 %v228, %v229
    %v234 = vadd.f32 %v233, %v230
    %v235 = vadd.f32 %v234, %v232
    %s236 = sld [smem:[#allocation2 + %s220]]
    %v237 = vstv %s236
    %v238 = vmul.f32 %v235, %v237
    %s239 = sadd.s32 8, 4
    %v240 = vld [vmem:[#allocation6 + $0x20] sm:$0xff]
    %v241 = vmul.f32 %v175, %v240
    %v242 = vrot.slane %v241, 4
    %v243 = vadd.f32 %v241, %v242
    %v244 = vrot.slane %v243, 2
    %v245 = vadd.f32 %v243, %v244
    %v246 = vrot.slane %v245, 1
    %v247 = vadd.f32 %v245, %v246
    %v248 = vmul.f32 %v238, %v197
    %v249 = vmul.f32 %v219, %v213
    %v250 = vmul.f32 %v202, %v231
    %v251 = vld [vmem:[#allocation6 + $0x4] sm:$0x1]
    %v252 = vmul.f32 %v187, %v251
    %v253 = vadd.f32 %v247, %v248
    %v254 = vadd.f32 %v253, %v249
    %v255 = vadd.f32 %v254, %v250
    %v256 = vadd.f32 %v255, %v252
    %s257 = sld [smem:[#allocation2 + %s239]]
    %v258 = vstv %s257
    %v259 = vmul.f32 %v256, %v258
    %s260 = sadd.s32 8, 5
    %v261 = vld [vmem:[#allocation6 + $0x28] sm:$0xff]
    %v262 = vmul.f32 %v175, %v261
    %v263 = vrot.slane %v262, 4
    %v264 = vadd.f32 %v262, %v263
    %v265 = vrot.slane %v264, 2
    %v266 = vadd.f32 %v264, %v265
    %v267 = vrot.slane %v266, 1
    %v268 = vadd.f32 %v266, %v267
    %v269 = vmul.f32 %v259, %v197
    %v270 = vmul.f32 %v238, %v213
    %v271 = vmul.f32 %v219, %v231
    %v272 = vmul.f32 %v202, %v251
    %v273 = vld [vmem:[#allocation6 + $0x3] sm:$0x1]
    %v274 = vmul.f32 %v187, %v273
    %v275 = vadd.f32 %v268, %v269
    %v276 = vadd.f32 %v275, %v270
    %v277 = vadd.f32 %v276, %v271
    %v278 = vadd.f32 %v277, %v272
    %v279 = vadd.f32 %v278, %v274
    %s280 = sld [smem:[#allocation2 + %s260]]
    %v281 = vstv %s280
    %v282 = vmul.f32 %v279, %v281
    %s283 = sadd.s32 8, 6
    %v284 = vld [vmem:[#allocation6 + $0x30] sm:$0xff]
    %v285 = vmul.f32 %v175, %v284
    %v286 = vrot.slane %v285, 4
    %v287 = vadd.f32 %v285, %v286
    %v288 = vrot.slane %v287, 2
    %v289 = vadd.f32 %v287, %v288
    %v290 = vrot.slane %v289, 1
    %v291 = vadd.f32 %v289, %v290
    %v292 = vmul.f32 %v282, %v197
    %v293 = vmul.f32 %v259, %v213
    %v294 = vmul.f32 %v238, %v231
    %v295 = vmul.f32 %v219, %v251
    %v296 = vmul.f32 %v202, %v273
    %v297 = vld [vmem:[#allocation6 + $0x2] sm:$0x1]
    %v298 = vmul.f32 %v187, %v297
    %v299 = vadd.f32 %v291, %v292
    %v300 = vadd.f32 %v299, %v293
    %v301 = vadd.f32 %v300, %v294
    %v302 = vadd.f32 %v301, %v295
    %v303 = vadd.f32 %v302, %v296
    %v304 = vadd.f32 %v303, %v298
    %s305 = sld [smem:[#allocation2 + %s283]]
    %v306 = vstv %s305
    %v307 = vmul.f32 %v304, %v306
    %s308 = sadd.s32 8, 7
    %v309 = vld [vmem:[#allocation6 + $0x38] sm:$0xff]
    %v310 = vmul.f32 %v175, %v309
    %v311 = vrot.slane %v310, 4
    %v312 = vadd.f32 %v310, %v311
    %v313 = vrot.slane %v312, 2
    %v314 = vadd.f32 %v312, %v313
    %v315 = vrot.slane %v314, 1
    %v316 = vadd.f32 %v314, %v315
    %v317 = vmul.f32 %v307, %v197
    %v318 = vmul.f32 %v282, %v213
    %v319 = vmul.f32 %v259, %v231
    %v320 = vmul.f32 %v238, %v251
    %v321 = vmul.f32 %v219, %v273
    %v322 = vmul.f32 %v202, %v297
    %v323 = vld [vmem:[#allocation6 + $0x1] sm:$0x1]
    %v324 = vmul.f32 %v187, %v323
    %v325 = vadd.f32 %v316, %v317
    %v326 = vadd.f32 %v325, %v318
    %v327 = vadd.f32 %v326, %v319
    %v328 = vadd.f32 %v327, %v320
    %v329 = vadd.f32 %v328, %v321
    %v330 = vadd.f32 %v329, %v322
    %v331 = vadd.f32 %v330, %v324
    %s332 = sld [smem:[#allocation2 + %s308]]
    %v333 = vstv %s332
    %v334 = vmul.f32 %v331, %v333
    %v336 = vrot.slane %v202, 7
    %v339 = vrot.slane %v219, 6
    %v342 = vrot.slane %v238, 5
    %v345 = vrot.slane %v259, 4
    %v348 = vrot.slane %v282, 3
    %v351 = vrot.slane %v307, 2
    %v354 = vrot.slane %v334, 1
    %v356 = vsel %vm162, %v187, %v336
    %v357 = vsel %vm164, %v356, %v339
    %v358 = vsel %vm166, %v357, %v342
    %v359 = vsel %vm168, %v358, %v345
    %v360 = vsel %vm170, %v359, %v348
    %v361 = vsel %vm172, %v360, %v351
    %v362 = vsel %vm174, %v361, %v354
    %s363 = scalar_lea.vmem [#allocation7], 8
    %364 = vst [vmem:[%s363] sm:$0xff] %v362
    // Predicated region
    $region22: #{tpu_custom_call.1} parent=1 // pred_check
      _
    $region23: #{tpu_custom_call.1} parent=1 // pred_check_branch
      %366 = sbr.rel (0) target = $region25
    $region24: #{tpu_custom_call.1} parent=1 // pred_region
      %s368 = ssub.s32 256, 256
      %369 = vsyncadd [#allocation4], %s368
      %s370 = sshll.u32 [#allocation7], 4
      %s371 = int_to_ptr.vmem [resolvable:$true] %s370
      %376 = dma.vmem_to_hbm [thread:$0]  %s371, 256, %s3, [#allocation4], 128, 128, 8
    $region25: #{tpu_custom_call.1} parent=1 // pred_fallthru
      _
    // Predicated region
    $region26: #{tpu_custom_call.1} parent=1 // pred_check
      _
    $region27: #{tpu_custom_call.1} parent=1 // pred_check_branch
      %378 = sbr.rel (0) target = $region29
    $region28: #{tpu_custom_call.1} parent=1 // pred_region
      %379 = dma.done [#allocation4], 256
    $region29: #{tpu_custom_call.1} parent=1 // pred_fallthru
      _
    %380 = vsyncpa [#allocation3], 1
    %381 = vsyncpa [#allocation4], 1
    %382 = vsyncpa [#allocation5], 1

</llo_original>
